<compile_context>
chip_gen: v7x
topology: tpu7x:2x2x1
jax: 0.10.0
libtpu: 0.0.40
codegen_flags: <defaults>
</compile_context>

<pallas_src>
import functools

import jax
import jax.numpy as jnp
from jax.experimental import pallas as pl
from jax.experimental.pallas import tpu as pltpu

# Layers with in_features <= this are computed as broadcast-FMAs on the VPU
# instead of an MXU matmul (the systolic array would be almost all padding).
_VPU_FIRST_LAYER_MAX_K = 8


def _pinn_kernel(num_layers, first_layer_on_vpu, *refs):
    """Fused MLP forward in transposed (feature-major) layout.

    refs = (xT_ref, w0, b0, w1, b1, ..., w_head, b_head, oT_ref)
      xT_ref : [in_features, block_batch]
      w_i    : [out_i, in_i]   (PyTorch nn.Linear layout)
      b_i    : [out_i, 1]
      oT_ref : [out_size, block_batch]
    All math in f32 (matches PyTorch f32 default).
    """
    x_ref = refs[0]
    o_ref = refs[-1]
    params = refs[1:-1]

    h = x_ref[...].astype(jnp.float32)          # [K0, B]
    for i in range(num_layers):
        w = params[2 * i][...].astype(jnp.float32)       # [out, in]
        b = params[2 * i + 1][...].astype(jnp.float32)   # [out, 1]
        k = w.shape[1]
        if i == 0 and first_layer_on_vpu:
            # Tiny-K first layer: outer-product broadcast FMAs on the VPU,
            # avoiding an MXU push/pop whose array would be >98% padding.
            y = b
            for j in range(k):
                y = y + w[:, j:j + 1] * h[j:j + 1, :]    # [out,1]*[1,B] -> [out,B]
        else:
            y = jnp.dot(w, h, preferred_element_type=jnp.float32) + b
        if i < num_layers - 1:
            h = jnp.maximum(y, 0.0)              # ReLU (dropout_rate == 0)
        else:
            h = y                                # head: no activation
    o_ref[...] = h.astype(o_ref.dtype)


def simple_pinn_forward(x, params, *, block_batch=512, vmem_limit_bytes=32 * 1024 * 1024):
    """Fused SimplePINN forward pass.

    Args:
      x: [batch, input_size] float32 array.
      params: list of (W, b) with W: [out_features, in_features] and
        b: [out_features] (PyTorch nn.Linear layout); last tuple is the head.
      block_batch: batch tile width on the lane axis. Must be a multiple of 128.
      vmem_limit_bytes: explicit scoped-VMEM cap (safe on v5e/v6e/v7x).
    Returns:
      [batch, output_size] float32 array.
    """
    batch, in_size = x.shape
    num_layers = len(params)                      # hidden layers + head
    out_size = params[-1][0].shape[0]

    assert block_batch % 128 == 0, "block_batch must be a multiple of 128 (lane axis)"

    # Pad the batch so it tiles evenly with a lane-aligned block.
    padded_batch = pl.cdiv(batch, 128) * 128
    if block_batch > padded_batch:
        block_batch = padded_batch
    padded_batch = pl.cdiv(padded_batch, block_batch) * block_batch

    # Transposed, lane-dense layout: batch on the last (lane) axis.
    x_t = jnp.zeros((in_size, padded_batch), x.dtype).at[:, :batch].set(x.T)

    grid = (padded_batch // block_batch,)

    in_specs = [pl.BlockSpec((in_size, block_batch), lambda i: (0, i))]
    flat_params = []
    param_bytes = 0
    flops_per_row = 0
    for (w, b) in params:
        out_f, in_f = w.shape
        b_col = jnp.reshape(b, (out_f, 1))
        # Weights/biases: single full block, constant index_map (no re-DMA
        # across grid steps; buffers are tiny so double-buffering is harmless).
        in_specs.append(pl.BlockSpec(w.shape, lambda i: (0, 0)))
        in_specs.append(pl.BlockSpec((out_f, 1), lambda i: (0, 0)))
        flat_params.extend([w, b_col])
        param_bytes += w.size * w.dtype.itemsize + b.size * b.dtype.itemsize
        flops_per_row += 2 * in_f * out_f

    out_spec = pl.BlockSpec((out_size, block_batch), lambda i: (0, i))

    first_layer_on_vpu = in_size <= _VPU_FIRST_LAYER_MAX_K
    kernel = functools.partial(_pinn_kernel, num_layers, first_layer_on_vpu)

    cost = pl.CostEstimate(
        flops=flops_per_row * padded_batch,
        transcendentals=0,
        bytes_accessed=(x_t.size * x_t.dtype.itemsize
                        + param_bytes
                        + out_size * padded_batch * x.dtype.itemsize),
    )

    out_t = pl.pallas_call(
        kernel,
        out_shape=jax.ShapeDtypeStruct((out_size, padded_batch), x.dtype),
        grid_spec=pltpu.PrefetchScalarGridSpec(
            num_scalar_prefetch=0,
            grid=grid,
            in_specs=in_specs,
            out_specs=out_spec,
        ),
        compiler_params=pltpu.CompilerParams(
            dimension_semantics=("parallel",),
            vmem_limit_bytes=vmem_limit_bytes,
        ),
        cost_estimate=cost,
    )(x_t, *flat_params)

    return out_t[:, :batch].T


def init_simple_pinn_params(key, input_size, hidden_layers, output_size):
    """Deterministic init matching nn.Linear (uniform +-1/sqrt(fan_in)).

    Returns list of (W [out, in], b [out]) tuples (PyTorch layout); last is the head.
    """
    sizes = [input_size] + list(hidden_layers) + [output_size]
    params = []
    for i in range(1, len(sizes)):
        fan_in, fan_out = sizes[i - 1], sizes[i]
        key, kw, kb = jax.random.split(key, 3)
        bound = 1.0 / jnp.sqrt(fan_in)
        w = jax.random.uniform(kw, (fan_out, fan_in), jnp.float32, -bound, bound)
        b = jax.random.uniform(kb, (fan_out,), jnp.float32, -bound, bound)
        params.append((w, b))
    return params


def _reference_forward(x, params):
    """Pure-JAX reference for correctness checking."""
    h = x
    for (w, b) in params[:-1]:
        h = jnp.maximum(h @ w.T + b, 0.0)
    wh, bh = params[-1]
    return h @ wh.T + bh


if __name__ == "__main__":
    # SimplePINN(input_size=2, hidden_layers=[32, 32], output_size=3)
    input_size = 2
    hidden_layers = [32, 32]
    output_size = 3
    batch = 256           # collocation points; tiled 128 lanes -> grid of 2

    key = jax.random.PRNGKey(0)
    key, kx = jax.random.split(key)
    x = jax.random.normal(kx, (batch, input_size), jnp.float32)

    params = init_simple_pinn_params(key, input_size, hidden_layers, output_size)

    out = simple_pinn_forward(x, params, block_batch=128)
    out = jax.block_until_ready(out)

    ref = _reference_forward(x, params)
    assert out.shape == (batch, output_size), out.shape
    assert jnp.allclose(out, ref, atol=1e-5, rtol=1e-5), "mismatch vs reference"

    print("KERNEL_OK")
</pallas_src>

<mosaic_0001>
module attributes {stable_mosaic.version = 11 : i64} {
  func.func @_pinn_kernel(%arg0: i32, %arg1: memref<2x128xf32, #tpu.memory_space<vmem>>, %arg2: memref<32x2xf32, #tpu.memory_space<vmem>>, %arg3: memref<32x1xf32, #tpu.memory_space<vmem>>, %arg4: memref<32x32xf32, #tpu.memory_space<vmem>>, %arg5: memref<32x1xf32, #tpu.memory_space<vmem>>, %arg6: memref<3x32xf32, #tpu.memory_space<vmem>>, %arg7: memref<3x1xf32, #tpu.memory_space<vmem>>, %arg8: memref<3x128xf32, #tpu.memory_space<vmem>>) attributes {dimension_semantics = [#tpu.dimension_semantics<parallel>], iteration_bounds = array<i64: 2>, scalar_prefetch = 0 : i64, scratch_operands = 0 : i64, tpu.core_type = #tpu.core_type<tc>, window_params = [{transform_indices = @transform_0, window_bounds = array<i64: 2, 128>}, {pipeline_mode = #tpu.pipeline_mode<synchronous>, transform_indices = @transform_1, window_bounds = array<i64: 32, 2>}, {pipeline_mode = #tpu.pipeline_mode<synchronous>, transform_indices = @transform_2, window_bounds = array<i64: 32, 1>}, {pipeline_mode = #tpu.pipeline_mode<synchronous>, transform_indices = @transform_3, window_bounds = array<i64: 32, 32>}, {pipeline_mode = #tpu.pipeline_mode<synchronous>, transform_indices = @transform_4, window_bounds = array<i64: 32, 1>}, {pipeline_mode = #tpu.pipeline_mode<synchronous>, transform_indices = @transform_5, window_bounds = array<i64: 3, 32>}, {pipeline_mode = #tpu.pipeline_mode<synchronous>, transform_indices = @transform_6, window_bounds = array<i64: 3, 1>}, {transform_indices = @transform_7, window_bounds = array<i64: 3, 128>}]} {
    %c0 = arith.constant 0 : index
    %c0_0 = arith.constant 0 : index
    %0 = vector.load %arg1[%c0, %c0_0] : memref<2x128xf32, #tpu.memory_space<vmem>>, vector<2x128xf32>
    %c0_1 = arith.constant 0 : index
    %c0_2 = arith.constant 0 : index
    %1 = vector.load %arg2[%c0_1, %c0_2] : memref<32x2xf32, #tpu.memory_space<vmem>>, vector<32x2xf32>
    %c0_3 = arith.constant 0 : index
    %c0_4 = arith.constant 0 : index
    %2 = vector.load %arg3[%c0_3, %c0_4] : memref<32x1xf32, #tpu.memory_space<vmem>>, vector<32x1xf32>
    %3 = vector.extract_strided_slice %1 {offsets = [0, 0], sizes = [32, 1], strides = [1, 1]} : vector<32x2xf32> to vector<32x1xf32>
    %4 = vector.extract_strided_slice %0 {offsets = [0, 0], sizes = [1, 128], strides = [1, 1]} : vector<2x128xf32> to vector<1x128xf32>
    %5 = vector.broadcast %3 : vector<32x1xf32> to vector<32x128xf32>
    %6 = vector.broadcast %4 : vector<1x128xf32> to vector<32x128xf32>
    %7 = arith.mulf %5, %6 : vector<32x128xf32>
    %8 = vector.broadcast %2 : vector<32x1xf32> to vector<32x128xf32>
    %9 = arith.addf %8, %7 : vector<32x128xf32>
    %10 = vector.extract_strided_slice %1 {offsets = [0, 1], sizes = [32, 1], strides = [1, 1]} : vector<32x2xf32> to vector<32x1xf32>
    %11 = vector.extract_strided_slice %0 {offsets = [1, 0], sizes = [1, 128], strides = [1, 1]} : vector<2x128xf32> to vector<1x128xf32>
    %12 = vector.broadcast %10 : vector<32x1xf32> to vector<32x128xf32>
    %13 = vector.broadcast %11 : vector<1x128xf32> to vector<32x128xf32>
    %14 = arith.mulf %12, %13 : vector<32x128xf32>
    %15 = arith.addf %9, %14 : vector<32x128xf32>
    %cst = arith.constant 0.000000e+00 : f32
    %16 = vector.broadcast %cst : f32 to vector<32x128xf32>
    %17 = arith.maximumf %15, %16 : vector<32x128xf32>
    %c0_5 = arith.constant 0 : index
    %c0_6 = arith.constant 0 : index
    %18 = vector.load %arg4[%c0_5, %c0_6] : memref<32x32xf32, #tpu.memory_space<vmem>>, vector<32x32xf32>
    %c0_7 = arith.constant 0 : index
    %c0_8 = arith.constant 0 : index
    %19 = vector.load %arg5[%c0_7, %c0_8] : memref<32x1xf32, #tpu.memory_space<vmem>>, vector<32x1xf32>
    %cst_9 = arith.constant dense<0.000000e+00> : vector<32x128xf32>
    %20 = tpu.matmul %18, %17, %cst_9 {dimension_numbers = #tpu.dot_dimension_numbers<[1], [0], [0], [1], [0, 0, 1, 1], [], []>} : vector<32x32xf32>, vector<32x128xf32>, vector<32x128xf32> -> vector<32x128xf32>
    %21 = vector.broadcast %19 : vector<32x1xf32> to vector<32x128xf32>
    %22 = arith.addf %20, %21 : vector<32x128xf32>
    %cst_10 = arith.constant 0.000000e+00 : f32
    %23 = vector.broadcast %cst_10 : f32 to vector<32x128xf32>
    %24 = arith.maximumf %22, %23 : vector<32x128xf32>
    %c0_11 = arith.constant 0 : index
    %c0_12 = arith.constant 0 : index
    %25 = vector.load %arg6[%c0_11, %c0_12] : memref<3x32xf32, #tpu.memory_space<vmem>>, vector<3x32xf32>
    %c0_13 = arith.constant 0 : index
    %c0_14 = arith.constant 0 : index
    %26 = vector.load %arg7[%c0_13, %c0_14] : memref<3x1xf32, #tpu.memory_space<vmem>>, vector<3x1xf32>
    %cst_15 = arith.constant dense<0.000000e+00> : vector<3x128xf32>
    %27 = tpu.matmul %25, %24, %cst_15 {dimension_numbers = #tpu.dot_dimension_numbers<[1], [0], [0], [1], [0, 0, 1, 1], [], []>} : vector<3x32xf32>, vector<32x128xf32>, vector<3x128xf32> -> vector<3x128xf32>
    %28 = vector.broadcast %26 : vector<3x1xf32> to vector<3x128xf32>
    %29 = arith.addf %27, %28 : vector<3x128xf32>
    %c0_16 = arith.constant 0 : index
    %c0_17 = arith.constant 0 : index
    %30 = vector.load %arg8[%c0_16, %c0_17] : memref<3x128xf32, #tpu.memory_space<vmem>>, vector<3x128xf32>
    tpu.vector_store %arg8[%c0_16, %c0_17], %29 {strides = array<i32>} : memref<3x128xf32, #tpu.memory_space<vmem>>, vector<3x128xf32>,
    return
  }
  func.func @transform_0(%arg0: i32) -> (i32, i32) {
    %c0_i32 = arith.constant 0 : i32
    %c0_i32_0 = arith.constant 0 : i32
    return %c0_i32, %arg0 : i32, i32
  }
  func.func @transform_1(%arg0: i32) -> (i32, i32) {
    %c0_i32 = arith.constant 0 : i32
    %c0_i32_0 = arith.constant 0 : i32
    %c0_i32_1 = arith.constant 0 : i32
    return %c0_i32, %c0_i32_0 : i32, i32
  }
  func.func @transform_2(%arg0: i32) -> (i32, i32) {
    %c0_i32 = arith.constant 0 : i32
    %c0_i32_0 = arith.constant 0 : i32
    %c0_i32_1 = arith.constant 0 : i32
    return %c0_i32, %c0_i32_0 : i32, i32
  }
  func.func @transform_3(%arg0: i32) -> (i32, i32) {
    %c0_i32 = arith.constant 0 : i32
    %c0_i32_0 = arith.constant 0 : i32
    %c0_i32_1 = arith.constant 0 : i32
    return %c0_i32, %c0_i32_0 : i32, i32
  }
  func.func @transform_4(%arg0: i32) -> (i32, i32) {
    %c0_i32 = arith.constant 0 : i32
    %c0_i32_0 = arith.constant 0 : i32
    %c0_i32_1 = arith.constant 0 : i32
    return %c0_i32, %c0_i32_0 : i32, i32
  }
  func.func @transform_5(%arg0: i32) -> (i32, i32) {
    %c0_i32 = arith.constant 0 : i32
    %c0_i32_0 = arith.constant 0 : i32
    %c0_i32_1 = arith.constant 0 : i32
    return %c0_i32, %c0_i32_0 : i32, i32
  }
  func.func @transform_6(%arg0: i32) -> (i32, i32) {
    %c0_i32 = arith.constant 0 : i32
    %c0_i32_0 = arith.constant 0 : i32
    %c0_i32_1 = arith.constant 0 : i32
    return %c0_i32, %c0_i32_0 : i32, i32
  }
  func.func @transform_7(%arg0: i32) -> (i32, i32) {
    %c0_i32 = arith.constant 0 : i32
    %c0_i32_0 = arith.constant 0 : i32
    return %c0_i32, %arg0 : i32, i32
  }
}

</mosaic_0001>

<llo_original>
// kernel: tpu_custom_call.1
$region0: #{tpu_custom_call.1}
  #allocation0 [shape = 'u32[]', space=smem, size = 0x4, offset = 0x4, fixed_abs, tag = 'smem constant byte address 0x4 - core index']
  #allocation1 [shape = 'u32[144,128]{1,0:T(1,128)}', space=vmem, size = 0x12000, scoped, tag = 'internal scratch']
  %s0 = inlined_call_operand.vmem [shape: f32[2,256], index: 0, kind: input, shape index: {}]
  %s1 = inlined_call_operand.vmem [shape: f32[32,2], index: 1, kind: input, shape index: {}]
  %s2 = inlined_call_operand.vmem [shape: f32[32,1], index: 2, kind: input, shape index: {}]
  %s3 = inlined_call_operand.vmem [shape: f32[32,32], index: 3, kind: input, shape index: {}]
  %s4 = inlined_call_operand.vmem [shape: f32[32,1], index: 4, kind: input, shape index: {}]
  %s5 = inlined_call_operand.vmem [shape: f32[3,32], index: 5, kind: input, shape index: {}]
  %s6 = inlined_call_operand.vmem [shape: f32[3,1], index: 6, kind: input, shape index: {}]
  %s7 = inlined_call_operand.hbm [shape: f32[3,256], index: 7, kind: output, shape index: {}]
  %s8 = sld [smem:[#allocation0]]
  $region61: #{tpu_custom_call.1} parent=0
    _
  %s10 = ssub.s32 1, %s8
  %s11 = scalar_select 0, %s10, %s8
  $region1: #{tpu_custom_call.1} parent=0
    #allocation2 [shape = 'u8[4096]{0}', space=vmem, size = 0x1000, scoped, tag = 'output window, operand 0']
    #allocation3 [shape = 's32[2]{0}', space=sflag, size = 0x8, scoped, tag = 'scoped memory for tpu_custom_call.1']
    %12 = vsyncpa [#allocation3], 0
    %s13 = scalar_lea.sflag [#allocation3], 1
    %14 = vsyncpa %s13, 0
    loop: start=0, step=1, limit=4
    $region2: #{tpu_custom_call.1} parent=1 // loop_pre_header
      _
    $region3: #{tpu_custom_call.1} parent=1 // loop_header
      %s16 = sphi 0, %s20
      %p17 = scmp.ge.s32.totalorder %s16, 4
      %s26 = sphi 0, %s28
      %s29 = sphi 0, %s26
      %s30 = sphi 0, %s29
      %s46 = sphi 0, %s30
      %s50 = sphi 0, %s50
      %s52 = sphi 0, %s50
      %s53 = sphi 0, %s52
      %s67 = sphi 0, %s53
      %s71 = sphi 0, %s71
      %s73 = sphi 0, %s71
      %s74 = sphi 0, %s73
      %s88 = sphi 0, %s74
      %s92 = sphi 0, %s92
      %s94 = sphi 0, %s92
      %s95 = sphi 0, %s94
      %s109 = sphi 0, %s95
      %s113 = sphi 0, %s113
      %s115 = sphi 0, %s113
      %s116 = sphi 0, %s115
      %s130 = sphi 0, %s116
      %s134 = sphi 0, %s134
      %s136 = sphi 0, %s134
      %s137 = sphi 0, %s136
      %s151 = sphi 0, %s137
      %s155 = sphi 0, %s155
      %s157 = sphi 0, %s155
      %s158 = sphi 0, %s157
      %s172 = sphi 0, %s158
      %s178 = sphi 0, %s180
      %s181 = sphi 0, %s178
      %s182 = sphi 0, %s181
      %s198 = sphi 0, %s182
    $region4: #{tpu_custom_call.1} parent=1 // loop_header_branch
      %19 = sbr.rel (%p17) target = $region8
    $region5: #{tpu_custom_call.1} parent=1 // loop_body
      %s21 = ssub.s32 %s16, 1
      %s22 = ssub.s32 %s16, 2
      %s23 = sadd.s32 %s16, 1
      %s24 = ssub.s32 %s16, %s23
      %p25 = scmp.eq.s32.totalorder %s24, 0
      %s27 = sadd.s32 %s26, 1
      %s28 = scalar_select %p25, %s26, %s27
      %p31 = pneg %p25
      %p32 = scmp.eq.s32.totalorder %s16, 1
      %p33 = por %p31, %p32
      %p34 = scmp.ne.s32.totalorder %s26, %s29
      %p35 = scmp.eq.s32.totalorder %s16, 0
      %p36 = por %p34, %p35
      %p37 = scmp.ne.s32.totalorder %s26, %s29
      %p38 = scmp.eq.s32.totalorder %s21, 1
      %p39 = por %p37, %p38
      %p40 = scmp.ne.s32.totalorder %s29, %s30
      %p41 = scmp.eq.s32.totalorder %s21, 0
      %p42 = por %p40, %p41
      %p43 = scmp.ne.s32.totalorder %s29, %s30
      %p44 = scmp.eq.s32.totalorder %s22, 1
      %p45 = por %p43, %p44
      %p47 = scmp.ne.s32.totalorder %s30, %s46
      %p48 = scmp.eq.s32.totalorder %s22, 0
      %p49 = por %p47, %p48
      %s51 = sadd.s32 %s50, 1
      %p54 = scmp.eq.s32.totalorder %s16, 1
      %p55 = scmp.ne.s32.totalorder %s50, %s52
      %p56 = scmp.eq.s32.totalorder %s16, 0
      %p57 = por %p55, %p56
      %p58 = scmp.ne.s32.totalorder %s50, %s52
      %p59 = scmp.eq.s32.totalorder %s21, 1
      %p60 = por %p58, %p59
      %p61 = scmp.ne.s32.totalorder %s52, %s53
      %p62 = scmp.eq.s32.totalorder %s21, 0
      %p63 = por %p61, %p62
      %p64 = scmp.ne.s32.totalorder %s52, %s53
      %p65 = scmp.eq.s32.totalorder %s22, 1
      %p66 = por %p64, %p65
      %p68 = scmp.ne.s32.totalorder %s53, %s67
      %p69 = scmp.eq.s32.totalorder %s22, 0
      %p70 = por %p68, %p69
      %s72 = sadd.s32 %s71, 1
      %p75 = scmp.eq.s32.totalorder %s16, 1
      %p76 = scmp.ne.s32.totalorder %s71, %s73
      %p77 = scmp.eq.s32.totalorder %s16, 0
      %p78 = por %p76, %p77
      %p79 = scmp.ne.s32.totalorder %s71, %s73
      %p80 = scmp.eq.s32.totalorder %s21, 1
      %p81 = por %p79, %p80
      %p82 = scmp.ne.s32.totalorder %s73, %s74
      %p83 = scmp.eq.s32.totalorder %s21, 0
      %p84 = por %p82, %p83
      %p85 = scmp.ne.s32.totalorder %s73, %s74
      %p86 = scmp.eq.s32.totalorder %s22, 1
      %p87 = por %p85, %p86
      %p89 = scmp.ne.s32.totalorder %s74, %s88
      %p90 = scmp.eq.s32.totalorder %s22, 0
      %p91 = por %p89, %p90
      %s93 = sadd.s32 %s92, 1
      %p96 = scmp.eq.s32.totalorder %s16, 1
      %p97 = scmp.ne.s32.totalorder %s92, %s94
      %p98 = scmp.eq.s32.totalorder %s16, 0
      %p99 = por %p97, %p98
      %p100 = scmp.ne.s32.totalorder %s92, %s94
      %p101 = scmp.eq.s32.totalorder %s21, 1
      %p102 = por %p100, %p101
      %p103 = scmp.ne.s32.totalorder %s94, %s95
      %p104 = scmp.eq.s32.totalorder %s21, 0
      %p105 = por %p103, %p104
      %p106 = scmp.ne.s32.totalorder %s94, %s95
      %p107 = scmp.eq.s32.totalorder %s22, 1
      %p108 = por %p106, %p107
      %p110 = scmp.ne.s32.totalorder %s95, %s109
      %p111 = scmp.eq.s32.totalorder %s22, 0
      %p112 = por %p110, %p111
      %s114 = sadd.s32 %s113, 1
      %p117 = scmp.eq.s32.totalorder %s16, 1
      %p118 = scmp.ne.s32.totalorder %s113, %s115
      %p119 = scmp.eq.s32.totalorder %s16, 0
      %p120 = por %p118, %p119
      %p121 = scmp.ne.s32.totalorder %s113, %s115
      %p122 = scmp.eq.s32.totalorder %s21, 1
      %p123 = por %p121, %p122
      %p124 = scmp.ne.s32.totalorder %s115, %s116
      %p125 = scmp.eq.s32.totalorder %s21, 0
      %p126 = por %p124, %p125
      %p127 = scmp.ne.s32.totalorder %s115, %s116
      %p128 = scmp.eq.s32.totalorder %s22, 1
      %p129 = por %p127, %p128
      %p131 = scmp.ne.s32.totalorder %s116, %s130
      %p132 = scmp.eq.s32.totalorder %s22, 0
      %p133 = por %p131, %p132
      %s135 = sadd.s32 %s134, 1
      %p138 = scmp.eq.s32.totalorder %s16, 1
      %p139 = scmp.ne.s32.totalorder %s134, %s136
      %p140 = scmp.eq.s32.totalorder %s16, 0
      %p141 = por %p139, %p140
      %p142 = scmp.ne.s32.totalorder %s134, %s136
      %p143 = scmp.eq.s32.totalorder %s21, 1
      %p144 = por %p142, %p143
      %p145 = scmp.ne.s32.totalorder %s136, %s137
      %p146 = scmp.eq.s32.totalorder %s21, 0
      %p147 = por %p145, %p146
      %p148 = scmp.ne.s32.totalorder %s136, %s137
      %p149 = scmp.eq.s32.totalorder %s22, 1
      %p150 = por %p148, %p149
      %p152 = scmp.ne.s32.totalorder %s137, %s151
      %p153 = scmp.eq.s32.totalorder %s22, 0
      %p154 = por %p152, %p153
      %s156 = sadd.s32 %s155, 1
      %p159 = scmp.eq.s32.totalorder %s16, 1
      %p160 = scmp.ne.s32.totalorder %s155, %s157
      %p161 = scmp.eq.s32.totalorder %s16, 0
      %p162 = por %p160, %p161
      %p163 = scmp.ne.s32.totalorder %s155, %s157
      %p164 = scmp.eq.s32.totalorder %s21, 1
      %p165 = por %p163, %p164
      %p166 = scmp.ne.s32.totalorder %s157, %s158
      %p167 = scmp.eq.s32.totalorder %s21, 0
      %p168 = por %p166, %p167
      %p169 = scmp.ne.s32.totalorder %s157, %s158
      %p170 = scmp.eq.s32.totalorder %s22, 1
      %p171 = por %p169, %p170
      %p173 = scmp.ne.s32.totalorder %s158, %s172
      %p174 = scmp.eq.s32.totalorder %s22, 0
      %p175 = por %p173, %p174
      %s176 = ssub.s32 %s16, %s23
      %p177 = scmp.eq.s32.totalorder %s176, 0
      %s179 = sadd.s32 %s178, 1
      %s180 = scalar_select %p177, %s178, %s179
      %p183 = pneg %p177
      %p184 = scmp.eq.s32.totalorder %s16, 1
      %p185 = por %p183, %p184
      %p186 = scmp.ne.s32.totalorder %s178, %s181
      %p187 = scmp.eq.s32.totalorder %s16, 0
      %p188 = por %p186, %p187
      %p189 = scmp.ne.s32.totalorder %s178, %s181
      %p190 = scmp.eq.s32.totalorder %s21, 1
      %p191 = por %p189, %p190
      %p192 = scmp.ne.s32.totalorder %s181, %s182
      %p193 = scmp.eq.s32.totalorder %s21, 0
      %p194 = por %p192, %p193
      %p195 = scmp.ne.s32.totalorder %s181, %s182
      %p196 = scmp.eq.s32.totalorder %s22, 1
      %p197 = por %p195, %p196
      %p199 = scmp.ne.s32.totalorder %s182, %s198
      %p200 = scmp.eq.s32.totalorder %s22, 0
      %p201 = por %p199, %p200
      %p202 = scmp.le.s32.totalorder 1, %s16
      %p203 = scmp.lt.s32.totalorder %s16, 3
      %p204 = pnand %p202, %p203
      %p205 = pneg %p204
      // Predicated region
      $region9: #{tpu_custom_call.1} parent=5 // pred_check
        _
      $region10: #{tpu_custom_call.1} parent=5 // pred_check_branch
        %207 = sbr.rel (%p204) target = $region12
      $region11: #{tpu_custom_call.1} parent=5 // pred_region
        %s208 = ssub.s32 %s16, 1
        // Predicated region
        $region13: #{tpu_custom_call.1} parent=11 // pred_check
          %p209 = pneg %p63
        $region14: #{tpu_custom_call.1} parent=11 // pred_check_branch
          %211 = sbr.rel (%p209) target = $region16
        $region15: #{tpu_custom_call.1} parent=11 // pred_region
          _
        $region16: #{tpu_custom_call.1} parent=11 // pred_fallthru
          _
        // Predicated region
        $region17: #{tpu_custom_call.1} parent=11 // pred_check
          %p212 = pneg %p84
        $region18: #{tpu_custom_call.1} parent=11 // pred_check_branch
          %214 = sbr.rel (%p212) target = $region20
        $region19: #{tpu_custom_call.1} parent=11 // pred_region
          _
        $region20: #{tpu_custom_call.1} parent=11 // pred_fallthru
          _
        // Predicated region
        $region21: #{tpu_custom_call.1} parent=11 // pred_check
          %p215 = pneg %p105
        $region22: #{tpu_custom_call.1} parent=11 // pred_check_branch
          %217 = sbr.rel (%p215) target = $region24
        $region23: #{tpu_custom_call.1} parent=11 // pred_region
          _
        $region24: #{tpu_custom_call.1} parent=11 // pred_fallthru
          _
        // Predicated region
        $region25: #{tpu_custom_call.1} parent=11 // pred_check
          %p218 = pneg %p126
        $region26: #{tpu_custom_call.1} parent=11 // pred_check_branch
          %220 = sbr.rel (%p218) target = $region28
        $region27: #{tpu_custom_call.1} parent=11 // pred_region
          _
        $region28: #{tpu_custom_call.1} parent=11 // pred_fallthru
          _
        // Predicated region
        $region29: #{tpu_custom_call.1} parent=11 // pred_check
          %p221 = pneg %p147
        $region30: #{tpu_custom_call.1} parent=11 // pred_check_branch
          %223 = sbr.rel (%p221) target = $region32
        $region31: #{tpu_custom_call.1} parent=11 // pred_region
          _
        $region32: #{tpu_custom_call.1} parent=11 // pred_fallthru
          _
        // Predicated region
        $region33: #{tpu_custom_call.1} parent=11 // pred_check
          %p224 = pneg %p168
        $region34: #{tpu_custom_call.1} parent=11 // pred_check_branch
          %226 = sbr.rel (%p224) target = $region36
        $region35: #{tpu_custom_call.1} parent=11 // pred_region
          _
        $region36: #{tpu_custom_call.1} parent=11 // pred_fallthru
          _
      $region12: #{tpu_custom_call.1} parent=5 // pred_fallthru
        _
      %p227 = scmp.lt.s32.totalorder %s16, 2
      // Predicated region
      $region37: #{tpu_custom_call.1} parent=5 // pred_check
        %p228 = pneg %p227
      $region38: #{tpu_custom_call.1} parent=5 // pred_check_branch
        %230 = sbr.rel (%p228) target = $region40
      $region39: #{tpu_custom_call.1} parent=5 // pred_region
        // Predicated region
        $region41: #{tpu_custom_call.1} parent=39 // pred_check
          %p231 = pneg %p36
        $region42: #{tpu_custom_call.1} parent=39 // pred_check_branch
          %233 = sbr.rel (%p231) target = $region44
        $region43: #{tpu_custom_call.1} parent=39 // pred_region
          %p234 = scmp.lt.s32.totalorder %s16, 1
          %s235 = scalar_select %p234, %s16, 1
          %s236 = smul.addr %s235, 2
          %s237 = scalar_lea.vmem %s0, %s236
        $region44: #{tpu_custom_call.1} parent=39 // pred_fallthru
          _
      $region40: #{tpu_custom_call.1} parent=5 // pred_fallthru
        _
      %p238 = scmp.le.s32.totalorder 1, %s16
      %p239 = scmp.lt.s32.totalorder %s16, 3
      %p240 = pnand %p238, %p239
      %p241 = pneg %p240
      // Predicated region
      $region45: #{tpu_custom_call.1} parent=5 // pred_check
        _
      $region46: #{tpu_custom_call.1} parent=5 // pred_check_branch
        %243 = sbr.rel (%p240) target = $region48
      $region47: #{tpu_custom_call.1} parent=5 // pred_region
        %s244 = ssub.s32 %s16, 1
        %p245 = scmp.lt.s32.totalorder %s21, 1
        %s246 = scalar_select %p245, %s21, 1
        %s247 = smul.addr %s246, 2
        %s248 = scalar_lea.vmem %s0, %s247
        %p249 = pneg %p42
        %p250 = pneg %p39
        %p251 = pneg %p63
        %p252 = pneg %p60
        %p253 = pneg %p84
        %p254 = pneg %p81
        %p255 = pneg %p105
        %p256 = pneg %p102
        %p257 = pneg %p126
        %p258 = pneg %p123
        %p259 = pneg %p147
        %p260 = pneg %p144
        %p261 = pneg %p168
        %p262 = pneg %p165
        %p263 = pneg %p194
        %p264 = pneg %p191
        %s265 = sand.u32 %s181, 1
        %s266 = scalar_lea.sflag [#allocation3], %s265
        %s267 = sand.u32 %s181, 1
        %s268 = smul.addr %s267, 4
        %s269 = scalar_lea.vmem [#allocation2], %s268
        %p270 = scmp.lt.s32.totalorder %s21, 1
        %s271 = scalar_select %p270, %s21, 1
        %s272 = smul.addr %s271, 2
        %s273 = scalar_lea.vmem %s0, %s272
        %v274 = vld [vmem:[%s273] sm:$0x3]
        %v275 = vld [vmem:[%s1] sm:$0xff]
        %v276 = vld [vmem:[%s1 + $0x8] sm:$0xff]
        %v277 = vld [vmem:[%s1 + $0x10] sm:$0xff]
        %v278 = vld [vmem:[%s1 + $0x18] sm:$0xff]
        %v279 = vld [vmem:[%s2] sm:$0xff]
        %v280 = vld [vmem:[%s2 + $0x8] sm:$0xff]
        %v281 = vld [vmem:[%s2 + $0x10] sm:$0xff]
        %v282 = vld [vmem:[%s2 + $0x18] sm:$0xff]
        %284 = vset.pattern.permute.xlu0 0
        %285 = vperm.xlu0 %284, %v275
        %v286 = vpop.permute.xlu0 %285
        %289 = vset.pattern.permute.xlu0 0
        %290 = vperm.xlu0 %289, %v276
        %v291 = vpop.permute.xlu0 %290
        %294 = vset.pattern.permute.xlu0 0
        %295 = vperm.xlu0 %294, %v277
        %v296 = vpop.permute.xlu0 %295
        %299 = vset.pattern.permute.xlu0 0
        %300 = vperm.xlu0 %299, %v278
        %v301 = vpop.permute.xlu0 %300
        %v303 = vlaneseq
        %v304 = vshrl.u32 %v303, 7
        %v305 = vsub.s32 0, %v304
        %v306 = vrot.slane %v274, %v305
        %v307 = vmul.f32 %v286, %v306
        %v308 = vmul.f32 %v291, %v306
        %v309 = vmul.f32 %v296, %v306
        %v310 = vmul.f32 %v301, %v306
        %312 = vset.pattern.permute.xlu0 0
        %313 = vperm.xlu0 %312, %v279
        %v314 = vpop.permute.xlu0 %313
        %317 = vset.pattern.permute.xlu0 0
        %318 = vperm.xlu0 %317, %v280
        %v319 = vpop.permute.xlu0 %318
        %322 = vset.pattern.permute.xlu0 0
        %323 = vperm.xlu0 %322, %v281
        %v324 = vpop.permute.xlu0 %323
        %327 = vset.pattern.permute.xlu0 0
        %328 = vperm.xlu0 %327, %v282
        %v329 = vpop.permute.xlu0 %328
        %v331 = vadd.f32 %v314, %v307
        %v332 = vadd.f32 %v319, %v308
        %v333 = vadd.f32 %v324, %v309
        %v334 = vadd.f32 %v329, %v310
        %335 = vset.pattern.permute.xlu0 1
        %336 = vperm.xlu0 %335, %v275
        %v337 = vpop.permute.xlu0 %336
        %339 = vset.pattern.permute.xlu0 1
        %340 = vperm.xlu0 %339, %v276
        %v341 = vpop.permute.xlu0 %340
        %343 = vset.pattern.permute.xlu0 1
        %344 = vperm.xlu0 %343, %v277
        %v345 = vpop.permute.xlu0 %344
        %347 = vset.pattern.permute.xlu0 1
        %348 = vperm.xlu0 %347, %v278
        %v349 = vpop.permute.xlu0 %348
        %v351 = vlaneseq
        %v352 = vshrl.u32 %v351, 7
        %v353 = vsub.s32 1, %v352
        %v354 = vrot.slane %v274, %v353
        %v355 = vmul.f32 %v337, %v354
        %v356 = vmul.f32 %v341, %v354
        %v357 = vmul.f32 %v345, %v354
        %v358 = vmul.f32 %v349, %v354
        %v359 = vadd.f32 %v331, %v355
        %v360 = vadd.f32 %v332, %v356
        %v361 = vadd.f32 %v333, %v357
        %v362 = vadd.f32 %v334, %v358
        %v363 = vmax.f32 %v359, 0.0
        %v364 = vmax.f32 %v360, 0.0
        %v365 = vmax.f32 %v361, 0.0
        %v366 = vmax.f32 %v362, 0.0
        %v367 = vld [vmem:[%s3] sm:$0xff]
        %v368 = vld [vmem:[%s3 + $0x8] sm:$0xff]
        %v369 = vld [vmem:[%s3 + $0x10] sm:$0xff]
        %v370 = vld [vmem:[%s3 + $0x18] sm:$0xff]
        %v371 = vld [vmem:[%s4] sm:$0xff]
        %v372 = vld [vmem:[%s4 + $0x8] sm:$0xff]
        %v373 = vld [vmem:[%s4 + $0x10] sm:$0xff]
        %v374 = vld [vmem:[%s4 + $0x18] sm:$0xff]
        %376 = vset.pattern.permute.xlu0 0
        %377 = vperm.xlu0 %376, %v371
        %v378 = vpop.permute.xlu0 %377
        %381 = vset.pattern.permute.xlu0 0
        %382 = vperm.xlu0 %381, %v372
        %v383 = vpop.permute.xlu0 %382
        %386 = vset.pattern.permute.xlu0 0
        %387 = vperm.xlu0 %386, %v373
        %v388 = vpop.permute.xlu0 %387
        %391 = vset.pattern.permute.xlu0 0
        %392 = vperm.xlu0 %391, %v374
        %v393 = vpop.permute.xlu0 %392
        %vm395 = vcmask 261120
        %v397 = vsel %vm395, %v367, 0
        %v400 = vsel %vm395, %v368, 0
        %v403 = vsel %vm395, %v369, 0
        %v406 = vsel %vm395, %v370, 0
        %408 = vmatprep.subr.mxu0 0.0
        %409 = vmatpush1.msra.mxu0 %v363
        %410 = vmatprep.subr.mxu0 0.0
        %411 = vmatpush1.msra.mxu0 %v364
        %412 = vmatprep.subr.mxu0 0.0
        %413 = vmatpush1.msra.mxu0 %v365
        %414 = vmatprep.subr.mxu0 0.0
        %415 = vmatpush1.msra.mxu0 %v366
        %416 = vmatprep.subr.mxu0 0.0
        %417 = vmatpush1.msra.mxu0 0.0
        %418 = vmatprep.subr.mxu0 0.0
        %419 = vmatpush1.msra.mxu0 0.0
        %420 = vmatprep.subr.mxu0 0.0
        %421 = vmatpush1.msra.mxu0 0.0
        %422 = vmatprep.subr.mxu0 0.0
        %423 = vmatpush1.msra.mxu0 0.0
        %424 = vmatprep.subr.mxu0 0.0
        %425 = vmatpush1.msra.mxu0 0.0
        %426 = vmatprep.subr.mxu0 0.0
        %427 = vmatpush1.msra.mxu0 0.0
        %428 = vmatprep.subr.mxu0 0.0
        %429 = vmatpush1.msra.mxu0 0.0
        %430 = vmatprep.subr.mxu0 0.0
        %431 = vmatpush1.msra.mxu0 0.0
        %432 = vmatprep.subr.mxu0 0.0
        %433 = vmatpush1.msra.mxu0 0.0
        %434 = vmatprep.subr.mxu0 0.0
        %435 = vmatpush1.msra.mxu0 0.0
        %436 = vmatprep.subr.mxu0 0.0
        %437 = vmatpush1.msra.mxu0 0.0
        %438 = vmatprep.subr.mxu0 0.0
        %439 = vmatpush1.msra.mxu0 0.0
        %440 = vmatprep.subr.mxu0 0.0
        %441 = vmatpush1.msra.mxu0 0.0
        %442 = vmatprep.subr.mxu0 0.0
        %443 = vmatpush1.msra.mxu0 0.0
        %444 = vmatprep.subr.mxu0 0.0
        %445 = vmatpush1.msra.mxu0 0.0
        %446 = vmatprep.subr.mxu0 0.0
        %447 = vmatpush1.msra.mxu0 0.0
        %448 = vmatprep.subr.mxu0 0.0
        %449 = vmatpush1.msra.mxu0 0.0
        %450 = vmatprep.subr.mxu0 0.0
        %451 = vmatpush1.msra.mxu0 0.0
        %452 = vmatprep.subr.mxu0 0.0
        %453 = vmatpush1.msra.mxu0 0.0
        %454 = vmatprep.subr.mxu0 0.0
        %455 = vmatpush1.msra.mxu0 0.0
        %456 = vmatprep.subr.mxu0 0.0
        %457 = vmatpush1.msra.mxu0 0.0
        %458 = vmatprep.subr.mxu0 0.0
        %459 = vmatpush1.msra.mxu0 0.0
        %460 = vmatprep.subr.mxu0 0.0
        %461 = vmatpush1.msra.mxu0 0.0
        %462 = vmatprep.subr.mxu0 0.0
        %463 = vmatpush1.msra.mxu0 0.0
        %464 = vmatprep.subr.mxu0 0.0
        %465 = vmatpush1.msra.mxu0 0.0
        %466 = vmatprep.subr.mxu0 0.0
        %467 = vmatpush1.msra.mxu0 0.0
        %468 = vmatprep.subr.mxu0 0.0
        %469 = vmatpush1.msra.mxu0 0.0
        %470 = vmatprep.subr.mxu0 0.0
        %471 = vmatpush1.msra.mxu0 0.0
        %472 = vmatprep.mubr.f32.mxu0 0.0
        %473 = vmatmul.mubr.f32.gmra.mrb[0].mxu0 %v397
        %v474 = vpop.f32.mrb[0].mxu0
        %v475 = vadd.f32 %v378, %v474
        %v476 = vpop.f32.mrb[0].mxu0
        %477 = vmatprep.mubr.f32.mxu0 0.0
        %478 = vmatmul.mubr.f32.gmra.mrb[0].mxu0 %v400
        %v479 = vpop.f32.mrb[0].mxu0
        %v480 = vadd.f32 %v383, %v479
        %v481 = vpop.f32.mrb[0].mxu0
        %482 = vmatprep.mubr.f32.mxu0 0.0
        %483 = vmatmul.mubr.f32.gmra.mrb[0].mxu0 %v403
        %v484 = vpop.f32.mrb[0].mxu0
        %v485 = vadd.f32 %v388, %v484
        %v486 = vpop.f32.mrb[0].mxu0
        %487 = vmatprep.mubr.f32.mxu0 0.0
        %488 = vmatmul.mubr.f32.gmra.mrb[0].mxu0 %v406
        %v489 = vpop.f32.mrb[0].mxu0
        %v490 = vadd.f32 %v393, %v489
        %v491 = vpop.f32.mrb[0].mxu0
        %492 = vdwg.mxu0
        %v493 = vmax.f32 %v475, 0.0
        %v494 = vmax.f32 %v480, 0.0
        %v495 = vmax.f32 %v485, 0.0
        %v496 = vmax.f32 %v490, 0.0
        %v497 = vld [vmem:[%s5] sm:$0x7]
        %v498 = vld [vmem:[%s6] sm:$0x7]
        %500 = vset.pattern.permute.xlu0 0
        %501 = vperm.xlu0 %500, %v498
        %v502 = vpop.permute.xlu0 %501
        %v505 = vsel %vm395, %v497, 0
        %507 = vmatprep.subr.mxu0 0.0
        %508 = vmatpush1.msra.mxu0 %v493
        %509 = vmatprep.subr.mxu0 0.0
        %510 = vmatpush1.msra.mxu0 %v494
        %511 = vmatprep.subr.mxu0 0.0
        %512 = vmatpush1.msra.mxu0 %v495
        %513 = vmatprep.subr.mxu0 0.0
        %514 = vmatpush1.msra.mxu0 %v496
        %515 = vmatprep.subr.mxu0 0.0
        %516 = vmatpush1.msra.mxu0 0.0
        %517 = vmatprep.subr.mxu0 0.0
        %518 = vmatpush1.msra.mxu0 0.0
        %519 = vmatprep.subr.mxu0 0.0
        %520 = vmatpush1.msra.mxu0 0.0
        %521 = vmatprep.subr.mxu0 0.0
        %522 = vmatpush1.msra.mxu0 0.0
        %523 = vmatprep.subr.mxu0 0.0
        %524 = vmatpush1.msra.mxu0 0.0
        %525 = vmatprep.subr.mxu0 0.0
        %526 = vmatpush1.msra.mxu0 0.0
        %527 = vmatprep.subr.mxu0 0.0
        %528 = vmatpush1.msra.mxu0 0.0
        %529 = vmatprep.subr.mxu0 0.0
        %530 = vmatpush1.msra.mxu0 0.0
        %531 = vmatprep.subr.mxu0 0.0
        %532 = vmatpush1.msra.mxu0 0.0
        %533 = vmatprep.subr.mxu0 0.0
        %534 = vmatpush1.msra.mxu0 0.0
        %535 = vmatprep.subr.mxu0 0.0
        %536 = vmatpush1.msra.mxu0 0.0
        %537 = vmatprep.subr.mxu0 0.0
        %538 = vmatpush1.msra.mxu0 0.0
        %539 = vmatprep.subr.mxu0 0.0
        %540 = vmatpush1.msra.mxu0 0.0
        %541 = vmatprep.subr.mxu0 0.0
        %542 = vmatpush1.msra.mxu0 0.0
        %543 = vmatprep.subr.mxu0 0.0
        %544 = vmatpush1.msra.mxu0 0.0
        %545 = vmatprep.subr.mxu0 0.0
        %546 = vmatpush1.msra.mxu0 0.0
        %547 = vmatprep.subr.mxu0 0.0
        %548 = vmatpush1.msra.mxu0 0.0
        %549 = vmatprep.subr.mxu0 0.0
        %550 = vmatpush1.msra.mxu0 0.0
        %551 = vmatprep.subr.mxu0 0.0
        %552 = vmatpush1.msra.mxu0 0.0
        %553 = vmatprep.subr.mxu0 0.0
        %554 = vmatpush1.msra.mxu0 0.0
        %555 = vmatprep.subr.mxu0 0.0
        %556 = vmatpush1.msra.mxu0 0.0
        %557 = vmatprep.subr.mxu0 0.0
        %558 = vmatpush1.msra.mxu0 0.0
        %559 = vmatprep.subr.mxu0 0.0
        %560 = vmatpush1.msra.mxu0 0.0
        %561 = vmatprep.subr.mxu0 0.0
        %562 = vmatpush1.msra.mxu0 0.0
        %563 = vmatprep.subr.mxu0 0.0
        %564 = vmatpush1.msra.mxu0 0.0
        %565 = vmatprep.subr.mxu0 0.0
        %566 = vmatpush1.msra.mxu0 0.0
        %567 = vmatprep.subr.mxu0 0.0
        %568 = vmatpush1.msra.mxu0 0.0
        %569 = vmatprep.subr.mxu0 0.0
        %570 = vmatpush1.msra.mxu0 0.0
        %571 = vmatprep.mubr.f32.mxu0 0.0
        %572 = vmatmul.mubr.f32.gmra.mrb[0].mxu0 %v505
        %v573 = vpop.f32.mrb[0].mxu0
        %v574 = vadd.f32 %v502, %v573
        %v575 = vpop.f32.mrb[0].mxu0
        %576 = vdwg.mxu0
        %577 = vst [vmem:[%s269] sm:$0x7] %v574
        %s578 = sand.u32 %s181, 1
        %s579 = scalar_lea.sflag [#allocation3], %s578
        %s580 = sand.u32 %s181, 1
        %s581 = smul.addr %s580, 4
        %s582 = scalar_lea.vmem [#allocation2], %s581
        // Predicated region
        $region49: #{tpu_custom_call.1} parent=47 // pred_check
          %p583 = pneg %p191
        $region50: #{tpu_custom_call.1} parent=47 // pred_check_branch
          %585 = sbr.rel (%p583) target = $region52
        $region51: #{tpu_custom_call.1} parent=47 // pred_region
          %s587 = ssub.s32 64, 64
          %588 = vsyncadd %s579, %s587
          %s589 = smul.addr %s21, 64
          %s590 = scalar_lea.hbm %s7, %s589
          %s592 = sshll.u32 %s582, 4
          %s593 = int_to_ptr.vmem [resolvable:$true] %s592
          %595 = dma.vmem_to_hbm [thread:$0]  %s593, 64, %s590, %s579
        $region52: #{tpu_custom_call.1} parent=47 // pred_fallthru
          _
      $region48: #{tpu_custom_call.1} parent=5 // pred_fallthru
        _
      %p596 = scmp.le.s32.totalorder 2, %s16
      // Predicated region
      $region53: #{tpu_custom_call.1} parent=5 // pred_check
        %p597 = pneg %p596
      $region54: #{tpu_custom_call.1} parent=5 // pred_check_branch
        %599 = sbr.rel (%p597) target = $region56
      $region55: #{tpu_custom_call.1} parent=5 // pred_region
        %s600 = ssub.s32 %s16, 2
        // Predicated region
        $region57: #{tpu_custom_call.1} parent=55 // pred_check
          %p601 = pneg %p197
        $region58: #{tpu_custom_call.1} parent=55 // pred_check_branch
          %603 = sbr.rel (%p601) target = $region60
        $region59: #{tpu_custom_call.1} parent=55 // pred_region
          %s604 = sand.u32 %s182, 1
          %s605 = scalar_lea.sflag [#allocation3], %s604
          %s606 = sand.u32 %s182, 1
          %s607 = smul.addr %s606, 4
          %s608 = scalar_lea.vmem [#allocation2], %s607
          %609 = dma.done %s605, 64
        $region60: #{tpu_custom_call.1} parent=55 // pred_fallthru
          _
      $region56: #{tpu_custom_call.1} parent=5 // pred_fallthru
        _
    $region6: #{tpu_custom_call.1} parent=1 // loop_footer
      %s20 = sadd.s32 1, %s16
    $region7: #{tpu_custom_call.1} parent=1 // loop_footer_branch
      %15 = sbr.rel target = $region3
    $region8: #{tpu_custom_call.1} parent=1 // loop_exit
      _
    %610 = vsyncpa [#allocation3], 1
    %s611 = scalar_lea.sflag [#allocation3], 1
    %612 = vsyncpa %s611, 1

</llo_original>
